<compile_context>
chip_gen: v6e
topology: v6e:2x2x1
jax: 0.10.0
libtpu: 0.0.40
codegen_flags: <defaults>
</compile_context>

<pallas_src>
import jax
import jax.numpy as jnp
from jax.experimental import pallas as pl
from jax.experimental.pallas import tpu as pltpu


# Large-negative logit used to fill padded rows/lanes of the loss input:
#   max(x,0)=0, x*y=0 (y padded with 0), log1p(exp(-|x|))=0  -> contribution 0.
# Safely representable in f16/bf16/f32 (no inf*0 NaN hazard).
_NEG_PAD = -1.0e4


# ---------------------------------------------------------------------------
# helpers
# ---------------------------------------------------------------------------
def _round_up(x, m):
    return ((x + m - 1) // m) * m


def _cdiv(a, b):
    return -(-a // b)


def _itemsize(dtype):
    return jnp.dtype(dtype).itemsize


def _sublane_gran(dtype):
    """Minimum second-to-last block-dim granularity for a dtype on TPU."""
    size = _itemsize(dtype)
    if size >= 4:
        return 8
    if size == 2:
        return 16
    return 32


def _plan_rows(b, granularity, block_boxes, bytes_per_row,
               min_blocks=2, target_block_bytes=1 << 20):
    """Pick (tile_rows, padded_rows, num_blocks) for the box axis."""
    g = int(granularity)
    max_tb = max(g, (int(block_boxes) // g) * g)          # guard user value
    b_min = _round_up(b, g)                                # minimal row padding
    target = _round_up(max(1, target_block_bytes // max(1, int(bytes_per_row))), g)
    tb = max(g, min(max_tb, target, b_min))
    nb = _cdiv(b_min, tb)
    # Prefer >= 2 grid steps so both v7x TensorCores get work (neutral v5e/v6e).
    if nb < min_blocks and b_min >= min_blocks * g:
        tb = _round_up(_cdiv(b_min, min_blocks), g)
        nb = _cdiv(b_min, tb)
    return tb, tb * nb, nb


def _pad2d(x, rows, cols, value=0.0):
    pr, pc = rows - x.shape[0], cols - x.shape[1]
    if pr == 0 and pc == 0:
        return x
    return jnp.pad(x, ((0, pr), (0, pc)), constant_values=value)


def _gather_class_planes(pred_mask_logits, classes, out_dtype):
    """XLA-side gather of each box's selected-class plane -> (B, Hm*Wm)."""
    B, C, Hm, Wm = pred_mask_logits.shape
    if C == 1:
        sel = pred_mask_logits[:, 0]                         # class-agnostic
    else:
        idx = classes.astype(jnp.int32)[:, None, None, None]
        sel = jnp.take_along_axis(pred_mask_logits, idx, axis=1)[:, 0]
    return sel.reshape(B, Hm * Wm).astype(out_dtype)


def _sel_dtype_for(logits_dtype, sel_dtype):
    # Keep an already-narrow conv-head output end-to-end; otherwise cast to bf16.
    return logits_dtype if _itemsize(logits_dtype) <= 2 else jnp.dtype(sel_dtype)


# ---------------------------------------------------------------------------
# Inference path: mask_rcnn_inference
#   out[b, 0] = sigmoid(logits[b, pred_classes[b]])
# ---------------------------------------------------------------------------
def _mask_inference_kernel(logits_ref, out_ref):
    # (TB, HWp) lane-dense blocks; f32 compute (v5e: no bf16 VPU/EUP).
    x = logits_ref[...].astype(jnp.float32)
    out_ref[...] = jax.nn.sigmoid(x).astype(out_ref.dtype)   # logistic -> EUP


def mask_rcnn_inference_pallas(pred_mask_logits, pred_classes=None, *,
                               block_boxes=512, sel_dtype=jnp.bfloat16):
    """pred_mask_logits: (B, C, Hm, Wm); pred_classes: (B,) int (None if C==1).

    Returns (B, 1, Hm, Wm) sigmoid probabilities of the predicted class."""
    B, C, Hm, Wm = pred_mask_logits.shape
    out_dtype = pred_mask_logits.dtype
    if B == 0:
        return jnp.zeros((0, 1, Hm, Wm), out_dtype)
    if C > 1 and pred_classes is None:
        raise ValueError("pred_classes is required for a class-specific mask head")

    HW = Hm * Wm
    HWp = _round_up(HW, 128)

    sdt = _sel_dtype_for(out_dtype, sel_dtype)
    sel = _gather_class_planes(pred_mask_logits, pred_classes, sdt)

    g = max(_sublane_gran(sdt), _sublane_gran(out_dtype))
    bytes_per_row = HWp * (_itemsize(sdt) + _itemsize(out_dtype))
    tb, Bp, nb = _plan_rows(B, g, block_boxes, bytes_per_row)

    sel = _pad2d(sel, Bp, HWp, 0.0)

    out = pl.pallas_call(
        _mask_inference_kernel,
        out_shape=jax.ShapeDtypeStruct((Bp, HWp), out_dtype),
        grid=(nb,),
        in_specs=[pl.BlockSpec((tb, HWp), lambda i: (i, 0))],
        out_specs=pl.BlockSpec((tb, HWp), lambda i: (i, 0)),
        compiler_params=pltpu.CompilerParams(
            dimension_semantics=("parallel",)),
    )(sel)

    if Bp > B or HWp > HW:
        out = out[:B, :HW]
    return out.reshape(B, 1, Hm, Wm)


# ---------------------------------------------------------------------------
# Training path: mask_rcnn_loss
#   loss = mean_{b,h,w} BCEWithLogits(logits[b, gt_classes[b]], gt_masks[b])
#          * loss_weight
# ---------------------------------------------------------------------------
def _mask_loss_kernel(logits_ref, gt_ref, out_ref):
    x = logits_ref[...].astype(jnp.float32)        # (tb, HWp) selected-class logits
    y = gt_ref[...].astype(jnp.float32)            # (tb, HWp) ground-truth masks
    # Numerically stable BCE-with-logits: max(x,0) - x*y + log1p(exp(-|x|)).
    # Padded rows/lanes carry x=_NEG_PAD, y=0 -> contribute exactly 0.
    per_elem = jnp.maximum(x, 0.0) - x * y + jnp.log1p(jnp.exp(-jnp.abs(x)))
    # Sublane-only reduction -> lane-dense (1, HWp) partial; final reduce in XLA.
    partial = jnp.sum(per_elem, axis=0, keepdims=True)
    out_ref[...] = partial.reshape(out_ref.shape)


def mask_rcnn_loss_pallas(pred_mask_logits, gt_classes, gt_masks,
                          loss_weight=1.0, *, block_boxes=512,
                          sel_dtype=jnp.bfloat16):
    """pred_mask_logits: (B, C, Hm, Wm); gt_classes: (B,) int;
    gt_masks: (B, Hm, Wm) (already cropped/resized to mask_side_len).

    Returns scalar loss_mask (already multiplied by loss_weight)."""
    B, C, Hm, Wm = pred_mask_logits.shape
    assert Hm == Wm, "Mask prediction must be square!"
    if B == 0:
        # detectron2: no instances -> zero loss keeping graph connectivity.
        return jnp.sum(pred_mask_logits) * 0.0 * loss_weight

    HW = Hm * Wm
    HWp = _round_up(HW, 128)

    sdt = _sel_dtype_for(pred_mask_logits.dtype, sel_dtype)
    sel = _gather_class_planes(pred_mask_logits, gt_classes, sdt)

    # Keep floating gt dtypes native (no redundant f32 materialization);
    # bool / int ground truth goes through bf16 (robust narrow path).
    gt = gt_masks
    if not jnp.issubdtype(gt.dtype, jnp.floating):
        gt = gt.astype(jnp.bfloat16)
    gt = gt.reshape(B, HW)
    gdt = gt.dtype

    g = max(_sublane_gran(sdt), _sublane_gran(gdt))
    bytes_per_row = HWp * (_itemsize(sdt) + _itemsize(gdt))
    tb, Bp, nb = _plan_rows(B, g, block_boxes, bytes_per_row)

    sel = _pad2d(sel, Bp, HWp, _NEG_PAD)   # padded logits -> 0 BCE contribution
    gt = _pad2d(gt, Bp, HWp, 0.0)

    partials = pl.pallas_call(
        _mask_loss_kernel,
        out_shape=jax.ShapeDtypeStruct((nb, 1, HWp), jnp.float32),
        grid=(nb,),
        in_specs=[pl.BlockSpec((tb, HWp), lambda i: (i, 0)),
                  pl.BlockSpec((tb, HWp), lambda i: (i, 0))],
        out_specs=pl.BlockSpec((1, 1, HWp), lambda i: (i, 0, 0)),
        compiler_params=pltpu.CompilerParams(
            dimension_semantics=("parallel",)),
    )(sel, gt)

    # reduction='mean' over the true B*HW elements (padding contributes 0).
    return (jnp.sum(partials) / jnp.float32(B * HW)) * jnp.float32(loss_weight)


# ---------------------------------------------------------------------------
# BaseMaskRCNNHead.forward
# ---------------------------------------------------------------------------
class BaseMaskRCNNHeadPallas:
    def __init__(self, loss_weight=1.0, vis_period=0):
        self.loss_weight = float(loss_weight)
        self.vis_period = vis_period
        self.training = True

    def layers(self, x):
        # TODO(synk): abstract in the reference; the subclass's conv tower is not
        # part of the base head, so identity here.
        return x

    def forward(self, x, gt_classes=None, gt_masks=None, pred_classes=None):
        x = self.layers(x)
        if self.training:
            loss = mask_rcnn_loss_pallas(x, gt_classes, gt_masks,
                                         loss_weight=self.loss_weight)
            # TODO(synk): accuracy / false_positive / false_negative event-storage
            # logging and vis_period image dumps are host-side bookkeeping.
            return {"loss_mask": loss}
        else:
            return mask_rcnn_inference_pallas(x, pred_classes)


# ---------------------------------------------------------------------------
# Pure-JAX references (use the same bf16-quantized gathered planes the kernels see)
# ---------------------------------------------------------------------------
def _quantized_sel(logits, classes, sel_dtype=jnp.bfloat16):
    B, C = logits.shape[:2]
    sel = logits[:, 0] if C == 1 else logits[jnp.arange(B), classes]
    sdt = _sel_dtype_for(logits.dtype, sel_dtype)
    return sel.astype(sdt).astype(jnp.float32)


def _ref_inference(logits, classes):
    return jax.nn.sigmoid(_quantized_sel(logits, classes))[:, None].astype(logits.dtype)


def _ref_loss(logits, classes, masks, loss_weight):
    x = _quantized_sel(logits, classes)
    y = masks.astype(jnp.float32)
    per = jnp.maximum(x, 0.0) - x * y + jnp.log1p(jnp.exp(-jnp.abs(x)))
    return jnp.mean(per) * loss_weight


if __name__ == "__main__":
    key = jax.random.PRNGKey(0)
    k1, k2, k3, k4 = jax.random.split(key, 4)

    # --- main case: B not a multiple of the sublane granularity (row padding) ---
    B, C, Hm, Wm = 10, 4, 16, 16
    pred_mask_logits = jax.random.normal(k1, (B, C, Hm, Wm), jnp.float32)
    gt_classes = jax.random.randint(k2, (B,), 0, C, jnp.int32)
    gt_masks = (jax.random.uniform(k3, (B, Hm, Wm)) > 0.5).astype(jnp.float32)
    pred_classes = jax.random.randint(k4, (B,), 0, C, jnp.int32)

    head = BaseMaskRCNNHeadPallas(loss_weight=1.0, vis_period=0)

    # training forward -> {'loss_mask': scalar}
    head.training = True
    losses = head.forward(pred_mask_logits, gt_classes=gt_classes, gt_masks=gt_masks)
    loss_val = jax.block_until_ready(losses["loss_mask"])
    ref_loss = _ref_loss(pred_mask_logits, gt_classes, gt_masks, 1.0)
    assert jnp.allclose(loss_val, ref_loss, rtol=1e-5, atol=1e-5), (loss_val, ref_loss)

    # inference forward -> (B, 1, Hm, Wm) sigmoid masks of the predicted class
    head.training = False
    masks_out = jax.block_until_ready(head.forward(pred_mask_logits,
                                                   pred_classes=pred_classes))
    ref_masks = _ref_inference(pred_mask_logits, pred_classes)
    assert masks_out.shape == (B, 1, Hm, Wm)
    assert jnp.allclose(masks_out, ref_masks, rtol=1e-5, atol=1e-5)

    # class-agnostic path (C == 1), no pred_classes needed
    agn_logits = pred_mask_logits[:, :1]
    agn_out = jax.block_until_ready(mask_rcnn_inference_pallas(agn_logits))
    agn_ref = jax.nn.sigmoid(agn_logits.astype(jnp.bfloat16).astype(jnp.float32))
    assert jnp.allclose(agn_out, agn_ref, rtol=1e-5, atol=1e-5)

    # --- secondary case: lane padding (14x14 -> 256 lanes), multi-block grid ---
    B2, C2, H2 = 40, 3, 14
    k5, k6, k7, k8 = jax.random.split(jax.random.PRNGKey(1), 4)
    logits2 = jax.random.normal(k5, (B2, C2, H2, H2), jnp.float32)
    cls2 = jax.random.randint(k6, (B2,), 0, C2, jnp.int32)
    gtm2 = (jax.random.uniform(k7, (B2, H2, H2)) > 0.5).astype(jnp.float32)
    pcls2 = jax.random.randint(k8, (B2,), 0, C2, jnp.int32)

    loss2 = jax.block_until_ready(mask_rcnn_loss_pallas(logits2, cls2, gtm2, 1.0))
    ref2 = _ref_loss(logits2, cls2, gtm2, 1.0)
    assert jnp.allclose(loss2, ref2, rtol=1e-5, atol=1e-5), (loss2, ref2)

    inf2 = jax.block_until_ready(mask_rcnn_inference_pallas(logits2, pcls2))
    refi2 = _ref_inference(logits2, pcls2)
    assert inf2.shape == (B2, 1, H2, H2)
    assert jnp.allclose(inf2, refi2, rtol=1e-5, atol=1e-5)

    print("KERNEL_OK")
</pallas_src>

<mosaic_0001>
module attributes {stable_mosaic.version = 11 : i64} {
  func.func @_mask_loss_kernel(%arg0: i32, %arg1: memref<16x256xbf16, #tpu.memory_space<vmem>>, %arg2: memref<16x256xf32, #tpu.memory_space<vmem>>, %arg3: memref<1x1x256xf32, #tpu.memory_space<vmem>>) attributes {dimension_semantics = [#tpu.dimension_semantics<parallel>], iteration_bounds = array<i64: 1>, scalar_prefetch = 0 : i64, scratch_operands = 0 : i64, tpu.core_type = #tpu.core_type<tc>, window_params = [{transform_indices = @transform_0, window_bounds = array<i64: 16, 256>}, {transform_indices = @transform_1, window_bounds = array<i64: 16, 256>}, {transform_indices = @transform_2, window_bounds = array<i64: 1, 1, 256>}]} {
    %c0 = arith.constant 0 : index
    %c0_0 = arith.constant 0 : index
    %0 = vector.load %arg1[%c0, %c0_0] : memref<16x256xbf16, #tpu.memory_space<vmem>>, vector<16x256xbf16>
    %1 = arith.extf %0 : vector<16x256xbf16> to vector<16x256xf32>
    %c0_1 = arith.constant 0 : index
    %c0_2 = arith.constant 0 : index
    %2 = vector.load %arg2[%c0_1, %c0_2] : memref<16x256xf32, #tpu.memory_space<vmem>>, vector<16x256xf32>
    %cst = arith.constant 0.000000e+00 : f32
    %3 = vector.broadcast %cst : f32 to vector<16x256xf32>
    %4 = arith.maximumf %1, %3 : vector<16x256xf32>
    %5 = arith.mulf %1, %2 : vector<16x256xf32>
    %6 = arith.subf %4, %5 : vector<16x256xf32>
    %7 = math.absf %1 : vector<16x256xf32>
    %cst_3 = arith.constant 0.000000e+00 : f32
    %8 = vector.broadcast %cst_3 : f32 to vector<16x256xf32>
    %9 = arith.subf %8, %7 : vector<16x256xf32>
    %10 = math.exp %9 : vector<16x256xf32>
    %11 = math.log1p %10 : vector<16x256xf32>
    %12 = arith.addf %6, %11 : vector<16x256xf32>
    %cst_4 = arith.constant dense<0.000000e+00> : vector<256xf32>
    %13 = vector.multi_reduction <add>, %12, %cst_4 [0] : vector<16x256xf32> to vector<256xf32>
    %14 = vector.shape_cast %13 : vector<256xf32> to vector<1x256xf32>
    %15 = vector.shape_cast %14 : vector<1x256xf32> to vector<1x1x256xf32>
    %c0_5 = arith.constant 0 : index
    %c0_6 = arith.constant 0 : index
    %c0_7 = arith.constant 0 : index
    %16 = vector.load %arg3[%c0_5, %c0_6, %c0_7] : memref<1x1x256xf32, #tpu.memory_space<vmem>>, vector<1x1x256xf32>
    tpu.vector_store %arg3[%c0_5, %c0_6, %c0_7], %15 {strides = array<i32>} : memref<1x1x256xf32, #tpu.memory_space<vmem>>, vector<1x1x256xf32>,
    return
  }
  func.func @transform_0(%arg0: i32) -> (i32, i32) {
    %c0_i32 = arith.constant 0 : i32
    %c0_i32_0 = arith.constant 0 : i32
    return %arg0, %c0_i32 : i32, i32
  }
  func.func @transform_1(%arg0: i32) -> (i32, i32) {
    %c0_i32 = arith.constant 0 : i32
    %c0_i32_0 = arith.constant 0 : i32
    return %arg0, %c0_i32 : i32, i32
  }
  func.func @transform_2(%arg0: i32) -> (i32, i32, i32) {
    %c0_i32 = arith.constant 0 : i32
    %c0_i32_0 = arith.constant 0 : i32
    %c0_i32_1 = arith.constant 0 : i32
    return %arg0, %c0_i32, %c0_i32_0 : i32, i32, i32
  }
}

</mosaic_0001>

<llo_original>
// kernel: tpu_custom_call.1
$region0: #{tpu_custom_call.1}
  #allocation0 [shape = 'u32[]', space=smem, size = 0x4, offset = 0x4, fixed_abs, tag = 'smem constant byte address 0x4 - core index']
  #allocation1 [shape = 'u32[144,128]{1,0:T(1,128)}', space=vmem, size = 0x12000, scoped, tag = 'internal scratch']
  %s0 = inlined_call_operand.hbm [shape: bf16[16,256], index: 0, kind: input, shape index: {}]
  %s1 = inlined_call_operand.hbm [shape: f32[16,256], index: 1, kind: input, shape index: {}]
  %s2 = inlined_call_operand.hbm [shape: f32[1,1,256], index: 2, kind: output, shape index: {}]
  %s3 = sld [smem:[#allocation0]]
  $region26: #{tpu_custom_call.1} parent=0
    _
  %s5 = ssub.s32 1, %s3
  %s6 = scalar_select 0, %s5, %s3
  $region1: #{tpu_custom_call.1} parent=0
    #allocation2 [shape = 'u8[8192]{0}', space=vmem, size = 0x2000, scoped, tag = 'input window, operand 0, single buffered']
    #allocation3 [shape = 's32[1]{0}', space=sflag, size = 0x4, scoped, tag = 'scoped memory for tpu_custom_call.1']
    #allocation4 [shape = 's32[1]{0}', space=sflag, size = 0x4, scoped, tag = 'scoped memory for tpu_custom_call.1']
    #allocation5 [shape = 'u8[16384]{0}', space=vmem, size = 0x4000, scoped, tag = 'input window, operand 1, single buffered']
    #allocation6 [shape = 's32[1]{0}', space=sflag, size = 0x4, scoped, tag = 'scoped memory for tpu_custom_call.1']
    #allocation7 [shape = 'u8[1024]{0}', space=vmem, size = 0x400, scoped, tag = 'output window, operand 0, single buffered']
    %7 = vsyncpa [#allocation3], 0
    %8 = vsyncpa [#allocation6], 0
    %9 = vsyncpa [#allocation4], 0
    // Predicated region
    $region2: #{tpu_custom_call.1} parent=1 // pred_check
      _
    $region3: #{tpu_custom_call.1} parent=1 // pred_check_branch
      %11 = sbr.rel (0) target = $region5
    $region4: #{tpu_custom_call.1} parent=1 // pred_region
      %s13 = ssub.s32 256, 256
      %14 = vsyncadd [#allocation3], %s13
      %s15 = sshll.u32 [#allocation2], 4
      %s16 = int_to_ptr.vmem [resolvable:$true] %s15
      %21 = dma.hbm_to_vmem [thread:$0]  %s0, 256, %s16, [#allocation3], 128, 128, 8
    $region5: #{tpu_custom_call.1} parent=1 // pred_fallthru
      _
    // Predicated region
    $region6: #{tpu_custom_call.1} parent=1 // pred_check
      _
    $region7: #{tpu_custom_call.1} parent=1 // pred_check_branch
      %23 = sbr.rel (0) target = $region9
    $region8: #{tpu_custom_call.1} parent=1 // pred_region
      %s25 = ssub.s32 512, 512
      %26 = vsyncadd [#allocation6], %s25
      %s27 = sshll.u32 [#allocation5], 4
      %s28 = int_to_ptr.vmem [resolvable:$true] %s27
      %33 = dma.hbm_to_vmem [thread:$0]  %s1, 512, %s28, [#allocation6], 256, 256, 16
    $region9: #{tpu_custom_call.1} parent=1 // pred_fallthru
      _
    // Predicated region
    $region10: #{tpu_custom_call.1} parent=1 // pred_check
      _
    $region11: #{tpu_custom_call.1} parent=1 // pred_check_branch
      %35 = sbr.rel (0) target = $region13
    $region12: #{tpu_custom_call.1} parent=1 // pred_region
      %36 = dma.done [#allocation3], 256
    $region13: #{tpu_custom_call.1} parent=1 // pred_fallthru
      _
    // Predicated region
    $region14: #{tpu_custom_call.1} parent=1 // pred_check
      _
    $region15: #{tpu_custom_call.1} parent=1 // pred_check_branch
      %38 = sbr.rel (0) target = $region17
    $region16: #{tpu_custom_call.1} parent=1 // pred_region
      %39 = dma.done [#allocation6], 512
    $region17: #{tpu_custom_call.1} parent=1 // pred_fallthru
      _
    %v40 = vld [vmem:[#allocation2] sm:$0xff]
    %v41 = vld [vmem:[#allocation2 + $0x8] sm:$0xff]
    %v42 = vunpack.c.l.bf16 %v40
    %v43 = vunpack.c.h.bf16 %v40
    %v44 = vunpack.c.l.bf16 %v41
    %v45 = vunpack.c.h.bf16 %v41
    %v46 = vld [vmem:[#allocation5] sm:$0xff]
    %v47 = vld [vmem:[#allocation5 + $0x8] sm:$0xff]
    %v48 = vld [vmem:[#allocation5 + $0x10] sm:$0xff]
    %v49 = vld [vmem:[#allocation5 + $0x18] sm:$0xff]
    %v50 = vmax.f32 %v42, 0.0
    %v51 = vmax.f32 %v43, 0.0
    %v52 = vmax.f32 %v44, 0.0
    %v53 = vmax.f32 %v45, 0.0
    %v54 = vmul.f32 %v42, %v46
    %v55 = vmul.f32 %v43, %v47
    %v56 = vmul.f32 %v44, %v48
    %v57 = vmul.f32 %v45, %v49
    %v58 = vsub.f32 %v50, %v54
    %v59 = vsub.f32 %v51, %v55
    %v60 = vsub.f32 %v52, %v56
    %v61 = vsub.f32 %v53, %v57
    %v62 = vand.u32 2147483647, %v42
    %v63 = vand.u32 2147483647, %v43
    %v64 = vand.u32 2147483647, %v44
    %v65 = vand.u32 2147483647, %v45
    %v66 = vsub.f32 0.0, %v62
    %v67 = vsub.f32 0.0, %v63
    %v68 = vsub.f32 0.0, %v64
    %v69 = vsub.f32 0.0, %v65
    %v70 = vmul.f32 %v66, 1.442695
    %v71 = vpow.pop %v70
    %v72 = vmul.f32 %v67, 1.442695
    %v73 = vpow.pop %v72
    %v74 = vmul.f32 %v68, 1.442695
    %v75 = vpow.pop %v74
    %v76 = vmul.f32 %v69, 1.442695
    %v77 = vpow.pop %v76
    %v78 = vadd.f32 %v71, 1.0
    %v79 = vlog2.pop %v78
    %v80 = vmul.f32 %v79, 0.6931472
    %v81 = vmul.f32 -0.5, %v71
    %v82 = vadd.f32 %v81, 1.0
    %v83 = vmul.f32 %v82, %v71
    %v84 = vand.u32 2147483647, %v71
    %vm85 = vcmp.lt.f32.partialorder %v84, 0.0004427343
    %v86 = vsel %vm85, %v83, %v80
    %v87 = vadd.f32 %v73, 1.0
    %v88 = vlog2.pop %v87
    %v89 = vmul.f32 %v88, 0.6931472
    %v90 = vmul.f32 -0.5, %v73
    %v91 = vadd.f32 %v90, 1.0
    %v92 = vmul.f32 %v91, %v73
    %v93 = vand.u32 2147483647, %v73
    %vm94 = vcmp.lt.f32.partialorder %v93, 0.0004427343
    %v95 = vsel %vm94, %v92, %v89
    %v96 = vadd.f32 %v75, 1.0
    %v97 = vlog2.pop %v96
    %v98 = vmul.f32 %v97, 0.6931472
    %v99 = vmul.f32 -0.5, %v75
    %v100 = vadd.f32 %v99, 1.0
    %v101 = vmul.f32 %v100, %v75
    %v102 = vand.u32 2147483647, %v75
    %vm103 = vcmp.lt.f32.partialorder %v102, 0.0004427343
    %v104 = vsel %vm103, %v101, %v98
    %v105 = vadd.f32 %v77, 1.0
    %v106 = vlog2.pop %v105
    %v107 = vmul.f32 %v106, 0.6931472
    %v108 = vmul.f32 -0.5, %v77
    %v109 = vadd.f32 %v108, 1.0
    %v110 = vmul.f32 %v109, %v77
    %v111 = vand.u32 2147483647, %v77
    %vm112 = vcmp.lt.f32.partialorder %v111, 0.0004427343
    %v113 = vsel %vm112, %v110, %v107
    %v114 = vadd.f32 %v58, %v86
    %v115 = vadd.f32 %v59, %v95
    %v116 = vadd.f32 %v60, %v104
    %v117 = vadd.f32 %v61, %v113
    %v118 = vadd.f32 %v114, %v116
    %v119 = vrot.slane %v118, 4
    %v120 = vadd.f32 %v118, %v119
    %v121 = vrot.slane %v120, 2
    %v122 = vadd.f32 %v120, %v121
    %v123 = vrot.slane %v122, 1
    %v124 = vadd.f32 %v122, %v123
    %v125 = vadd.f32 %v115, %v117
    %v126 = vrot.slane %v125, 4
    %v127 = vadd.f32 %v125, %v126
    %v128 = vrot.slane %v127, 2
    %v129 = vadd.f32 %v127, %v128
    %v130 = vrot.slane %v129, 1
    %v131 = vadd.f32 %v129, %v130
    %v134 = vcombine.low %v124, %v131
    %v136 = vunpack.c.l.s4 1966171168
    %v137 = vunpack.c.0.s8 %v136
    %v138 = vlaneseq
    %v139 = vshrl.u32 %v138, 7
    %v140 = vsub.s32 %v137, %v139
    %v141 = vrot.slane %v134, %v140
    %v143 = vunpack.c.l.s4 1966171168
    %v144 = vunpack.c.0.s8 %v143
    %v145 = vlaneseq
    %v146 = vshrl.u32 %v145, 7
    %v147 = vsub.s32 %v144, %v146
    %v148 = vrot.slane %v141, %v147
    %v150 = vlaneseq
    %vm151 = vcmp.ge.s32.totalorder %v150, 0
    %vm152 = vcmp.lt.s32.totalorder %v150, 256
    %vm153 = vmand %vm151, %vm152
    %154 = vst.msk [vmem:[#allocation7] sm:$0x3] %vm153, %v148
    // Predicated region
    $region18: #{tpu_custom_call.1} parent=1 // pred_check
      _
    $region19: #{tpu_custom_call.1} parent=1 // pred_check_branch
      %156 = sbr.rel (0) target = $region21
    $region20: #{tpu_custom_call.1} parent=1 // pred_region
      %s158 = ssub.s32 32, 32
      %159 = vsyncadd [#allocation4], %s158
      %s161 = sshll.u32 [#allocation7], 4
      %s162 = int_to_ptr.vmem [resolvable:$true] %s161
      %164 = dma.vmem_to_hbm [thread:$0]  %s162, 32, %s2, [#allocation4]
    $region21: #{tpu_custom_call.1} parent=1 // pred_fallthru
      _
    // Predicated region
    $region22: #{tpu_custom_call.1} parent=1 // pred_check
      _
    $region23: #{tpu_custom_call.1} parent=1 // pred_check_branch
      %166 = sbr.rel (0) target = $region25
    $region24: #{tpu_custom_call.1} parent=1 // pred_region
      %167 = dma.done [#allocation4], 32
    $region25: #{tpu_custom_call.1} parent=1 // pred_fallthru
      _
    %168 = vsyncpa [#allocation3], 1
    %169 = vsyncpa [#allocation6], 1
    %170 = vsyncpa [#allocation4], 1

</llo_original>
